<compile_context>
chip_gen: v5e
topology: v5e:2x2
jax: 0.10.0
libtpu: 0.0.40
codegen_flags: <defaults>
</compile_context>

<pallas_src>
import functools

import jax
import jax.numpy as jnp
from jax.experimental import pallas as pl
from jax.experimental.pallas import tpu as pltpu

_LANE = 128
_SUBLANE = 8
_NEG_LARGE = -1e30   # finite "minus infinity" baked into padded bias columns


def _categorical_head_kernel(x_ref, w_ref, b_ref, *out_refs):
    logits_ref = out_refs[0]

    # Linear: [TB, K] @ [K, Npad] + [1, Npad] -> raw logits [TB, Npad].
    # Padded columns: weight cols are 0 and bias cols are -1e30, so
    # z_pad = -1e30 and exp(z_pad - m) underflows to exactly 0 -> no effect
    # on max / logsumexp (no per-step iota/select needed).
    z = jnp.dot(x_ref[...], w_ref[...], preferred_element_type=jnp.float32)
    z = z + b_ref[...]                       # broadcast over batch rows

    # Numerically-stable log-softmax / softmax over the last axis.
    m = jnp.max(z, axis=-1, keepdims=True)
    e = jnp.exp(z - m)
    s = jnp.sum(e, axis=-1, keepdims=True)
    lse = m + jnp.log(s)

    logits_ref[...] = (z - lse).astype(logits_ref.dtype)     # Categorical.logits
    if len(out_refs) > 1:
        probs_ref = out_refs[1]
        probs_ref[...] = (e / s).astype(probs_ref.dtype)      # Categorical.probs


def pad_categorical_params(weight, bias):
    """Pad the nn.Linear parameters to a lane-dense layout ONCE at init time.

    weight : [N, K]  (PyTorch nn.Linear layout)
    bias   : [N]

    Returns (w_p [K, n_pad] f32, b_p [1, n_pad] f32, N).  Padded weight
    columns are zero and padded bias columns are -1e30 so the kernel needs no
    per-step masking.
    """
    N, K = weight.shape
    n_pad = max(_LANE, pl.cdiv(N, _LANE) * _LANE)
    w_p = jnp.zeros((K, n_pad), jnp.float32).at[:, :N].set(
        weight.T.astype(jnp.float32))
    b_p = jnp.full((1, n_pad), _NEG_LARGE, jnp.float32).at[0, :N].set(
        bias.astype(jnp.float32))
    return w_p, b_p, N


def categorical_head(x, w_p, b_p, num_outputs, *, block_b: int = 2048,
                     compute_probs: bool = True,
                     vmem_budget_bytes: int = 40 << 20):
    """Forward pass of the Categorical head.

    x           : [B, K] activations
    w_p, b_p    : padded params from `pad_categorical_params`
    num_outputs : number of valid action columns N (<= w_p.shape[1])

    Returns (normalized_logits [B, N], probs [B, N]) if compute_probs else
    just the normalized logits — the tensors backing the FixedCategorical
    distribution returned by the PyTorch module's forward.
    """
    B, K = x.shape
    K2, n_pad = w_p.shape
    assert K == K2 and n_pad % _LANE == 0
    N = num_outputs
    n_out = 2 if compute_probs else 1

    x_p = x.astype(jnp.float32)
    # Only pad the batch to a sublane multiple when strictly necessary;
    # tile-divisibility is handled by a cdiv grid with a partial last block.
    b_sub = pl.cdiv(B, _SUBLANE) * _SUBLANE
    if b_sub != B:
        x_p = jnp.zeros((b_sub, K), jnp.float32).at[:B, :].set(x_p)

    # ---- batch tile selection -------------------------------------------
    # Large tiles amortize the ~0.35 us per-grid-step cost (kernel is HBM /
    # overhead bound), but keep >=2 grid steps when the batch allows so the
    # "parallel" axis shards across v7x's two TensorCores.
    tb = min(block_b, b_sub)
    tb = max(_SUBLANE, (tb // _SUBLANE) * _SUBLANE)
    if b_sub >= 2 * _SUBLANE and pl.cdiv(b_sub, tb) < 2:
        tb = pl.cdiv(pl.cdiv(b_sub, 2), _SUBLANE) * _SUBLANE

    def vmem_est(t):
        # double-buffered x tile + (2-buffered) resident weight/bias + outputs
        return 4 * (2 * t * K + 2 * K * n_pad + 2 * n_pad + 2 * n_out * t * n_pad)

    # Cap the tile against a conservative VMEM budget (v5e scoped default is
    # 16 MiB, v7x physical VMEM is 64 MiB); pass an explicit limit below.
    while tb > _SUBLANE and vmem_est(tb) > vmem_budget_bytes:
        tb = max(_SUBLANE, ((tb // 2) // _SUBLANE) * _SUBLANE)

    grid = (pl.cdiv(b_sub, tb),)   # last block may be partial: rows are
                                   # independent and OOB writes are masked.

    flops = 2 * b_sub * K * n_pad + 6 * b_sub * n_pad
    transcendentals = b_sub * n_pad + b_sub            # exp per elem + log per row
    bytes_accessed = 4 * (b_sub * K + K * n_pad + n_pad + n_out * b_sub * n_pad)

    out_shape = tuple(jax.ShapeDtypeStruct((b_sub, n_pad), jnp.float32)
                      for _ in range(n_out))
    out_specs = [pl.BlockSpec((tb, n_pad), lambda i: (i, 0))
                 for _ in range(n_out)]

    outs = pl.pallas_call(
        _categorical_head_kernel,
        out_shape=out_shape,
        grid_spec=pltpu.PrefetchScalarGridSpec(
            num_scalar_prefetch=0,
            grid=grid,
            in_specs=[
                pl.BlockSpec((tb, K), lambda i: (i, 0)),      # x: tiled over batch
                pl.BlockSpec((K, n_pad), lambda i: (0, 0)),   # weight: resident
                pl.BlockSpec((1, n_pad), lambda i: (0, 0)),   # bias: resident
            ],
            out_specs=out_specs,
        ),
        compiler_params=pltpu.CompilerParams(
            dimension_semantics=("parallel",),                # megacore on v7x
            vmem_limit_bytes=min(max(2 * vmem_est(tb), 16 << 20), 64 << 20),
        ),
        cost_estimate=pl.CostEstimate(
            flops=flops,
            transcendentals=transcendentals,
            bytes_accessed=bytes_accessed,
        ),
    )(x_p, w_p, b_p)

    # Strip batch / lane padding.  (If the consumer can read the padded
    # [b_sub, n_pad] buffers directly, skip this slice to avoid an extra HBM
    # pass; padded logits columns hold ~-1e30 and padded probs columns 0.)
    logits = outs[0][:B, :N]
    if compute_probs:
        return logits, outs[1][:B, :N]
    return logits


def init_orthogonal(key, out_features, in_features, gain=0.01):
    """Deterministic orthogonal init matching nn.init.orthogonal_ semantics
    (QR of a Gaussian, sign-corrected), scaled by gain. Returns [out, in]."""
    a = jax.random.normal(key, (out_features, in_features), dtype=jnp.float32)
    transpose = out_features < in_features
    if transpose:
        a = a.T
    q, r = jnp.linalg.qr(a)
    d = jnp.sign(jnp.diagonal(r))
    q = q * d[None, :]
    if transpose:
        q = q.T
    return gain * q.astype(jnp.float32)


if __name__ == "__main__":
    num_inputs = 32     # hidden size fed to the head
    num_outputs = 16    # number of discrete actions
    batch = 8

    key = jax.random.PRNGKey(0)
    k_x, k_w = jax.random.split(key)

    # Parameters: orthogonal weight (gain=0.01), zero bias — as in __init__.
    weight = init_orthogonal(k_w, num_outputs, num_inputs, gain=0.01)  # [N, K]
    bias = jnp.zeros((num_outputs,), dtype=jnp.float32)

    # Pad parameters once (init-time), reused on every forward call.
    w_p, b_p, n_valid = pad_categorical_params(weight, bias)

    x = jax.random.normal(k_x, (batch, num_inputs), dtype=jnp.float32)

    logits, probs = categorical_head(x, w_p, b_p, n_valid)
    jax.block_until_ready((logits, probs))

    # Reference check in plain JAX.
    z_ref = jnp.dot(x, weight.T, precision=jax.lax.Precision.HIGHEST) + bias[None, :]
    logits_ref = z_ref - jax.scipy.special.logsumexp(z_ref, axis=-1, keepdims=True)
    probs_ref = jax.nn.softmax(z_ref, axis=-1)
    assert jnp.allclose(logits, logits_ref, atol=1e-5, rtol=1e-5)
    assert jnp.allclose(probs, probs_ref, atol=1e-5, rtol=1e-5)
    assert jnp.allclose(jnp.sum(probs, axis=-1), 1.0, atol=1e-5)

    # TODO(synk): FixedCategorical.sample() (stochastic draw) is left to the
    # host/JAX side; only the deterministic forward tensors are computed here.

    print("KERNEL_OK")
</pallas_src>

<mosaic_0001>
module attributes {stable_mosaic.version = 11 : i64} {
  func.func @_categorical_head_kernel(%arg0: i32, %arg1: memref<8x32xf32, #tpu.memory_space<vmem>>, %arg2: memref<32x128xf32, #tpu.memory_space<vmem>>, %arg3: memref<1x128xf32, #tpu.memory_space<vmem>>, %arg4: memref<8x128xf32, #tpu.memory_space<vmem>>, %arg5: memref<8x128xf32, #tpu.memory_space<vmem>>) attributes {dimension_semantics = [#tpu.dimension_semantics<parallel>], iteration_bounds = array<i64: 1>, scalar_prefetch = 0 : i64, scratch_operands = 0 : i64, tpu.core_type = #tpu.core_type<tc>, window_params = [{transform_indices = @transform_0, window_bounds = array<i64: 8, 32>}, {pipeline_mode = #tpu.pipeline_mode<synchronous>, transform_indices = @transform_1, window_bounds = array<i64: 32, 128>}, {pipeline_mode = #tpu.pipeline_mode<synchronous>, transform_indices = @transform_2, window_bounds = array<i64: 1, 128>}, {transform_indices = @transform_3, window_bounds = array<i64: 8, 128>}, {transform_indices = @transform_4, window_bounds = array<i64: 8, 128>}]} {
    %c0 = arith.constant 0 : index
    %c0_0 = arith.constant 0 : index
    %0 = vector.load %arg1[%c0, %c0_0] : memref<8x32xf32, #tpu.memory_space<vmem>>, vector<8x32xf32>
    %c0_1 = arith.constant 0 : index
    %c0_2 = arith.constant 0 : index
    %1 = vector.load %arg2[%c0_1, %c0_2] : memref<32x128xf32, #tpu.memory_space<vmem>>, vector<32x128xf32>
    %cst = arith.constant dense<0.000000e+00> : vector<8x128xf32>
    %2 = tpu.matmul %0, %1, %cst {dimension_numbers = #tpu.dot_dimension_numbers<[1], [0], [0], [1], [0, 0, 1, 1], [], []>} : vector<8x32xf32>, vector<32x128xf32>, vector<8x128xf32> -> vector<8x128xf32>
    %c0_3 = arith.constant 0 : index
    %c0_4 = arith.constant 0 : index
    %3 = vector.load %arg3[%c0_3, %c0_4] : memref<1x128xf32, #tpu.memory_space<vmem>>, vector<1x128xf32>
    %4 = vector.broadcast %3 : vector<1x128xf32> to vector<8x128xf32>
    %5 = arith.addf %2, %4 : vector<8x128xf32>
    %cst_5 = arith.constant dense<0xFF800000> : vector<8xf32>
    %6 = vector.multi_reduction <maximumf>, %5, %cst_5 [1] : vector<8x128xf32> to vector<8xf32>
    %7 = vector.shape_cast %6 : vector<8xf32> to vector<8x1xf32>
    %8 = vector.broadcast %7 : vector<8x1xf32> to vector<8x128xf32>
    %9 = arith.subf %5, %8 : vector<8x128xf32>
    %10 = math.exp %9 : vector<8x128xf32>
    %cst_6 = arith.constant dense<0.000000e+00> : vector<8xf32>
    %11 = vector.multi_reduction <add>, %10, %cst_6 [1] : vector<8x128xf32> to vector<8xf32>
    %12 = vector.shape_cast %11 : vector<8xf32> to vector<8x1xf32>
    %13 = math.log %12 : vector<8x1xf32>
    %14 = arith.addf %7, %13 : vector<8x1xf32>
    %15 = vector.broadcast %14 : vector<8x1xf32> to vector<8x128xf32>
    %16 = arith.subf %5, %15 : vector<8x128xf32>
    %c0_7 = arith.constant 0 : index
    %c0_8 = arith.constant 0 : index
    %17 = vector.load %arg4[%c0_7, %c0_8] : memref<8x128xf32, #tpu.memory_space<vmem>>, vector<8x128xf32>
    tpu.vector_store %arg4[%c0_7, %c0_8], %16 {strides = array<i32>} : memref<8x128xf32, #tpu.memory_space<vmem>>, vector<8x128xf32>,
    %18 = vector.broadcast %12 : vector<8x1xf32> to vector<8x128xf32>
    %19 = arith.divf %10, %18 : vector<8x128xf32>
    %c0_9 = arith.constant 0 : index
    %c0_10 = arith.constant 0 : index
    %20 = vector.load %arg5[%c0_9, %c0_10] : memref<8x128xf32, #tpu.memory_space<vmem>>, vector<8x128xf32>
    tpu.vector_store %arg5[%c0_9, %c0_10], %19 {strides = array<i32>} : memref<8x128xf32, #tpu.memory_space<vmem>>, vector<8x128xf32>,
    return
  }
  func.func @transform_0(%arg0: i32) -> (i32, i32) {
    %c0_i32 = arith.constant 0 : i32
    %c0_i32_0 = arith.constant 0 : i32
    return %arg0, %c0_i32 : i32, i32
  }
  func.func @transform_1(%arg0: i32) -> (i32, i32) {
    %c0_i32 = arith.constant 0 : i32
    %c0_i32_0 = arith.constant 0 : i32
    %c0_i32_1 = arith.constant 0 : i32
    return %c0_i32, %c0_i32_0 : i32, i32
  }
  func.func @transform_2(%arg0: i32) -> (i32, i32) {
    %c0_i32 = arith.constant 0 : i32
    %c0_i32_0 = arith.constant 0 : i32
    %c0_i32_1 = arith.constant 0 : i32
    return %c0_i32, %c0_i32_0 : i32, i32
  }
  func.func @transform_3(%arg0: i32) -> (i32, i32) {
    %c0_i32 = arith.constant 0 : i32
    %c0_i32_0 = arith.constant 0 : i32
    return %arg0, %c0_i32 : i32, i32
  }
  func.func @transform_4(%arg0: i32) -> (i32, i32) {
    %c0_i32 = arith.constant 0 : i32
    %c0_i32_0 = arith.constant 0 : i32
    return %arg0, %c0_i32 : i32, i32
  }
}

</mosaic_0001>

<llo_original>
// kernel: tpu_custom_call.1
$region0: #{tpu_custom_call.1}
  #allocation0 [shape = 'u32[]', space=smem, size = 0x4, offset = 0x4, fixed_abs, tag = 'smem constant byte address 0x4 - core index']
  #allocation1 [shape = 'u32[72,128]{1,0:T(1,128)}', space=vmem, size = 0x9000, scoped, tag = 'internal scratch']
  %s0 = inlined_call_operand.hbm [shape: f32[8,32], index: 0, kind: input, shape index: {}]
  %s1 = inlined_call_operand.hbm [shape: f32[32,128], index: 1, kind: input, shape index: {}]
  %s2 = inlined_call_operand.vmem [shape: f32[1,128], index: 2, kind: input, shape index: {}]
  %s3 = inlined_call_operand.hbm [shape: f32[8,128], index: 3, kind: output, shape index: {0}]
  %s4 = inlined_call_operand.hbm [shape: f32[8,128], index: 4, kind: output, shape index: {1}]
  %5 = xla_tuple %s3, %s4
  %s6 = sld [smem:[#allocation0]]
  $region38: #{tpu_custom_call.1} parent=0
    _
  %s8 = ssub.s32 1, %s6
  %s9 = scalar_select 0, %s8, %s6
  $region1: #{tpu_custom_call.1} parent=0
    #allocation2 [shape = 'u8[4096]{0}', space=vmem, size = 0x1000, scoped, tag = 'input window, operand 0, single buffered']
    #allocation3 [shape = 's32[1]{0}', space=sflag, size = 0x4, scoped, tag = 'scoped memory for tpu_custom_call.1']
    #allocation4 [shape = 's32[1]{0}', space=sflag, size = 0x4, scoped, tag = 'scoped memory for tpu_custom_call.1']
    #allocation5 [shape = 'u8[16384]{0}', space=vmem, size = 0x4000, scoped, tag = 'input window, operand 1, single buffered']
    #allocation6 [shape = 's32[1]{0}', space=sflag, size = 0x4, scoped, tag = 'scoped memory for tpu_custom_call.1']
    #allocation7 [shape = 'u8[4096]{0}', space=vmem, size = 0x1000, scoped, tag = 'output window, operand 0, single buffered']
    #allocation8 [shape = 'u8[4096]{0}', space=vmem, size = 0x1000, scoped, tag = 'output window, operand 1, single buffered']
    #allocation9 [shape = 's32[1]{0}', space=sflag, size = 0x4, scoped, tag = 'scoped memory for tpu_custom_call.1']
    %10 = vsyncpa [#allocation3], 0
    %11 = vsyncpa [#allocation6], 0
    %12 = vsyncpa [#allocation4], 0
    %13 = vsyncpa [#allocation9], 0
    // Predicated region
    $region2: #{tpu_custom_call.1} parent=1 // pred_check
      _
    $region3: #{tpu_custom_call.1} parent=1 // pred_check_branch
      %15 = sbr.rel (0) target = $region5
    $region4: #{tpu_custom_call.1} parent=1 // pred_region
      %17 = vsyncadd [#allocation3], 0
      %s19 = sshll.u32 %s0, 4
      %s20 = int_to_ptr.hbm [resolvable:$true] %s19
      %s21 = sshll.u32 [#allocation2], 4
      %s22 = int_to_ptr.vmem [resolvable:$true] %s21
      %24 = dma.hbm_to_vmem [thread:$0]  %s20, 128, %s22, [#allocation3]
    $region5: #{tpu_custom_call.1} parent=1 // pred_fallthru
      _
    // Predicated region
    $region6: #{tpu_custom_call.1} parent=1 // pred_check
      _
    $region7: #{tpu_custom_call.1} parent=1 // pred_check_branch
      %26 = sbr.rel (0) target = $region9
    $region8: #{tpu_custom_call.1} parent=1 // pred_region
      %28 = vsyncadd [#allocation6], 0
      %s29 = sshll.u32 %s1, 4
      %s30 = int_to_ptr.hbm [resolvable:$true] %s29
      %s31 = sshll.u32 [#allocation5], 4
      %s32 = int_to_ptr.vmem [resolvable:$true] %s31
      %37 = dma.hbm_to_vmem [thread:$0]  %s30, 512, %s32, [#allocation6], 128, 128, 8
    $region9: #{tpu_custom_call.1} parent=1 // pred_fallthru
      _
    // Predicated region
    $region10: #{tpu_custom_call.1} parent=1 // pred_check
      _
    $region11: #{tpu_custom_call.1} parent=1 // pred_check_branch
      %39 = sbr.rel (0) target = $region13
    $region12: #{tpu_custom_call.1} parent=1 // pred_region
      _
    $region13: #{tpu_custom_call.1} parent=1 // pred_fallthru
      _
    // Predicated region
    $region14: #{tpu_custom_call.1} parent=1 // pred_check
      _
    $region15: #{tpu_custom_call.1} parent=1 // pred_check_branch
      %41 = sbr.rel (0) target = $region17
    $region16: #{tpu_custom_call.1} parent=1 // pred_region
      %43 = dma.done [#allocation3], 128
    $region17: #{tpu_custom_call.1} parent=1 // pred_fallthru
      _
    // Predicated region
    $region18: #{tpu_custom_call.1} parent=1 // pred_check
      _
    $region19: #{tpu_custom_call.1} parent=1 // pred_check_branch
      %45 = sbr.rel (0) target = $region21
    $region20: #{tpu_custom_call.1} parent=1 // pred_region
      %47 = dma.done [#allocation6], 512
    $region21: #{tpu_custom_call.1} parent=1 // pred_fallthru
      _
    %v48 = vld [vmem:[#allocation2] sm:$0xff]
    %v49 = vld [vmem:[#allocation5] sm:$0xff]
    %v50 = vld [vmem:[#allocation5 + $0x8] sm:$0xff]
    %v51 = vld [vmem:[#allocation5 + $0x10] sm:$0xff]
    %v52 = vld [vmem:[#allocation5 + $0x18] sm:$0xff]
    %v53 = vld [vmem:[%s2] sm:$0x1]
    %v55 = vperm.slane %v53, 0
    %vm57 = vcmask 261120
    %v59 = vsel %vm57, %v48, 0
    %61 = vmatpush.msra.mxu0 0.0
    %62 = vmatpush.msra.mxu0 0.0
    %63 = vmatpush.msra.mxu0 0.0
    %64 = vmatpush.msra.mxu0 0.0
    %65 = vmatpush.msra.mxu0 0.0
    %66 = vmatpush.msra.mxu0 0.0
    %67 = vmatpush.msra.mxu0 0.0
    %68 = vmatpush.msra.mxu0 0.0
    %69 = vmatpush.msra.mxu0 0.0
    %70 = vmatpush.msra.mxu0 0.0
    %71 = vmatpush.msra.mxu0 0.0
    %72 = vmatpush.msra.mxu0 0.0
    %73 = vmatpush.msra.mxu0 %v52
    %74 = vmatpush.msra.mxu0 %v51
    %75 = vmatpush.msra.mxu0 %v50
    %76 = vmatpush.msra.mxu0 %v49
    %77 = vmatmul.f32.gmra.mxu0 %v59
    %v78 = vpop.f32.mrf.mxu0
    %v79 = vadd.f32 %v55, %v78
    %80 = vdwg.mxu0
    %81 = vmax.xlane.f32.xlu0 %v79
    %v82 = vpop.xlane.xlu0 %81
    %v83 = vsub.f32 %v79, %v82
    %v84 = vmul.f32 %v83, 1.442695
    %v85 = vpow.pop %v84
    %86 = vadd.xlane.f32.xlu0 %v85
    %v87 = vpop.xlane.xlu0 %86
    %v88 = vlog2.pop %v87
    %v89 = vmul.f32 %v88, 0.6931472
    %v90 = vadd.f32 %v82, %v89
    %v91 = vsub.f32 %v79, %v90
    %92 = vst [vmem:[#allocation7] sm:$0xff] %v91
    %v93 = vrcp.pop %v87
    %v94 = vmul.f32 %v87, %v93
    %v95 = vsub.f32 1.0, %v94
    %v96 = vmul.f32 %v93, %v95
    %v97 = vadd.f32 %v93, %v96
    %vm98 = vweird.f32 %v87
    %vm99 = vweird.f32 %v93
    %vm100 = vmor %vm98, %vm99
    %v101 = vsel %vm100, %v93, %v97
    %v102 = vand.u32 2147483647, %v87
    %vm103 = vcmp.eq.f32.partialorder %v102, 8.507059e+37
    %v104 = vand.u32 %v87, 2147483648
    %v105 = vor.u32 1.1754944e-38, %v104
    %v106 = vsel %vm103, %v105, %v101
    %v107 = vmul.f32 %v85, %v106
    %108 = vst [vmem:[#allocation8] sm:$0xff] %v107
    // Predicated region
    $region22: #{tpu_custom_call.1} parent=1 // pred_check
      _
    $region23: #{tpu_custom_call.1} parent=1 // pred_check_branch
      %110 = sbr.rel (0) target = $region25
    $region24: #{tpu_custom_call.1} parent=1 // pred_region
      %112 = vsyncadd [#allocation4], 0
      %s114 = sshll.u32 [#allocation7], 4
      %s115 = int_to_ptr.vmem [resolvable:$true] %s114
      %s116 = sshll.u32 %s3, 4
      %s117 = int_to_ptr.hbm [resolvable:$true] %s116
      %119 = dma.vmem_to_hbm [thread:$0]  %s115, 128, %s117, [#allocation4]
    $region25: #{tpu_custom_call.1} parent=1 // pred_fallthru
      _
    // Predicated region
    $region26: #{tpu_custom_call.1} parent=1 // pred_check
      _
    $region27: #{tpu_custom_call.1} parent=1 // pred_check_branch
      %121 = sbr.rel (0) target = $region29
    $region28: #{tpu_custom_call.1} parent=1 // pred_region
      %123 = vsyncadd [#allocation9], 0
      %s125 = sshll.u32 [#allocation8], 4
      %s126 = int_to_ptr.vmem [resolvable:$true] %s125
      %s127 = sshll.u32 %s4, 4
      %s128 = int_to_ptr.hbm [resolvable:$true] %s127
      %130 = dma.vmem_to_hbm [thread:$0]  %s126, 128, %s128, [#allocation9]
    $region29: #{tpu_custom_call.1} parent=1 // pred_fallthru
      _
    // Predicated region
    $region30: #{tpu_custom_call.1} parent=1 // pred_check
      _
    $region31: #{tpu_custom_call.1} parent=1 // pred_check_branch
      %132 = sbr.rel (0) target = $region33
    $region32: #{tpu_custom_call.1} parent=1 // pred_region
      %134 = dma.done [#allocation4], 128
    $region33: #{tpu_custom_call.1} parent=1 // pred_fallthru
      _
    // Predicated region
    $region34: #{tpu_custom_call.1} parent=1 // pred_check
      _
    $region35: #{tpu_custom_call.1} parent=1 // pred_check_branch
      %136 = sbr.rel (0) target = $region37
    $region36: #{tpu_custom_call.1} parent=1 // pred_region
      %138 = dma.done [#allocation9], 128
    $region37: #{tpu_custom_call.1} parent=1 // pred_fallthru
      _
    %139 = vsyncpa [#allocation3], 1
    %140 = vsyncpa [#allocation6], 1
    %141 = vsyncpa [#allocation4], 1
    %142 = vsyncpa [#allocation9], 1

</llo_original>
